<compile_context>
chip_gen: v7x
topology: tpu7x:2x2x1
jax: 0.10.0
libtpu: 0.0.40
codegen_flags: <defaults>
</compile_context>

<pallas_src>
import functools

import jax
import jax.numpy as jnp
from jax.experimental import pallas as pl
from jax.experimental.pallas import tpu as pltpu

ALPHA = 0.25
GAMMA = 2
SIZE_AVERAGE = True


def _vmem_capacity_bytes():
    """Generation-aware VMEM capacity; conservative (v7x) fallback."""
    try:
        return int(pltpu.get_tpu_info().vmem_capacity_bytes)
    except Exception:
        return 64 << 20  # v7x per-TC VMEM; safe lower bound everywhere


def _focal_loss_kernel(x_ref, t_ref, part_ref, *, alpha, gamma, rows_rem):
    x = x_ref[...].astype(jnp.float32)        # (tile_n, C) logits (cast after DMA)
    t = t_ref[...]                            # (tile_n, 1) int32 targets

    # --- log-sum-exp over the class (lane) axis -----------------------------
    m = jnp.max(x, axis=1, keepdims=True)                         # (tile_n, 1)
    denom = jnp.sum(jnp.exp(x - m), axis=1, keepdims=True)        # (tile_n, 1)

    # one-hot gather of the target logit (scatter_(1, ids, 1.0) equivalent)
    cls_ids = jax.lax.broadcasted_iota(jnp.int32, x.shape, dimension=1)
    x_t = jnp.sum(jnp.where(cls_ids == t, x, 0.0), axis=1, keepdims=True)

    log_p = (x_t - m) - jnp.log(denom)                            # log softmax @ target
    probs = jnp.exp(log_p)                                        # target-class prob
    one_minus = 1.0 - probs

    if gamma == 2:
        focal_w = one_minus * one_minus        # compile-time gamma=2 -> plain VALU mul
    else:
        focal_w = jnp.power(jnp.maximum(one_minus, 0.0), gamma)

    batch_loss = (-alpha) * focal_w * log_p                       # (tile_n, 1)

    # per-tile partial sum, stored lane-dense (all 128 lanes hold the value)
    part_ref[...] = jnp.full(part_ref.shape, jnp.sum(batch_loss), jnp.float32)

    if rows_rem:  # trace-time: only emitted when N % tile_n != 0
        # Last (partial) tile: out-of-bounds rows hold unspecified data, so
        # re-emit the sum with those rows selected to exact 0.0 (select, not
        # multiply, so garbage/NaN logits cannot poison the reduction).
        @pl.when(pl.program_id(0) == pl.num_programs(0) - 1)
        def _():
            row_ids = jax.lax.broadcasted_iota(jnp.int32, batch_loss.shape, 0)
            masked = jnp.where(row_ids < rows_rem, batch_loss, 0.0)
            part_ref[...] = jnp.full(part_ref.shape, jnp.sum(masked), jnp.float32)


def focal_loss(inputs, targets, *, alpha=ALPHA, gamma=GAMMA,
               size_average=SIZE_AVERAGE, tile_rows=None):
    """inputs: (N, C) logits (f32 or bf16); targets: (N,) int class ids -> scalar."""
    N, C = inputs.shape
    t2d = targets.reshape(N, 1).astype(jnp.int32)

    # --- tile sizing by VMEM byte budget (padded VMEM footprint per row) ----
    itemsize = jnp.dtype(inputs.dtype).itemsize
    lanes_c = pl.cdiv(C, 128) * 128                    # lane padding of the logits block
    per_row = 2 * (lanes_c * itemsize + 128 * 4)       # x2 double buffer; + (tile_n,1) i32 targets

    vmem_cap = _vmem_capacity_bytes()
    block_budget = max(8 << 20, min(vmem_cap // 2 - (8 << 20), 40 << 20))

    n_rounded = ((N + 15) // 16) * 16                  # multiple of 16 -> bf16 (16,128) packing
    if tile_rows is None:
        tile_n = max(16, (block_budget // per_row) // 16 * 16)
        tile_n = min(tile_n, n_rounded)
        # v7x megacore: keep >= 2 tiles for large batches so both TCs get work.
        if N >= 2048 and tile_n >= n_rounded:
            tile_n = max(16, ((pl.cdiv(N, 2) + 15) // 16) * 16)
    else:
        tile_n = min(max(16, (tile_rows // 16) * 16), n_rounded)

    num_tiles = pl.cdiv(N, tile_n)
    rows_rem = N % tile_n          # 0 => last block is full, mask code not traced

    needed = tile_n * per_row + 2 * 128 * 4 + (2 << 20)          # blocks + headroom
    vmem_limit = int(min(48 << 20, max(32 << 20, needed)))       # <= v7x 64 MiB physical
    # TODO(synk): if C is so large that even a 16-row block blows this budget,
    # tile the class axis with an online (streaming) log-sum-exp instead.

    kernel = functools.partial(
        _focal_loss_kernel, alpha=alpha, gamma=gamma, rows_rem=rows_rem)

    partials = pl.pallas_call(
        kernel,
        out_shape=jax.ShapeDtypeStruct((1, 128 * num_tiles), jnp.float32),
        grid_spec=pltpu.PrefetchScalarGridSpec(
            num_scalar_prefetch=0,
            grid=(num_tiles,),                          # no jnp.pad of the logits: partial
            in_specs=[                                  # last block + in-kernel mask
                pl.BlockSpec((tile_n, C), lambda i: (i, 0)),
                pl.BlockSpec((tile_n, 1), lambda i: (i, 0)),
            ],
            out_specs=pl.BlockSpec((1, 128), lambda i: (0, i)),
        ),
        compiler_params=pltpu.CompilerParams(
            dimension_semantics=("parallel",),
            vmem_limit_bytes=vmem_limit,
        ),
    )(inputs, t2d)

    # tiny final reduction in plain JAX (one value per tile)
    total = jnp.sum(partials.reshape(num_tiles, 128)[:, 0])
    return total / N if size_average else total


def focal_loss_ref(inputs, targets, *, alpha=ALPHA, gamma=GAMMA,
                   size_average=SIZE_AVERAGE):
    p = jax.nn.softmax(inputs.astype(jnp.float32), axis=1)
    probs = jnp.take_along_axis(p, targets.reshape(-1, 1), axis=1)
    log_p = jnp.log(probs)
    batch_loss = -alpha * jnp.power(1.0 - probs, gamma) * log_p
    return jnp.mean(batch_loss) if size_average else jnp.sum(batch_loss)


if __name__ == "__main__":
    key = jax.random.PRNGKey(0)
    k1, k2, k3, k4, k5, k6 = jax.random.split(key, 6)

    # Case 1: small batch, single (partial) tile -> exercises ragged-row mask
    N, C = 8, 32
    inputs = jax.random.normal(k1, (N, C), dtype=jnp.float32)
    targets = jax.random.randint(k2, (N,), 0, C, dtype=jnp.int32)
    loss = focal_loss(inputs, targets)
    jax.block_until_ready(loss)
    ref = focal_loss_ref(inputs, targets)
    assert jnp.allclose(loss, ref, rtol=1e-5, atol=1e-6), (loss, ref)

    # Case 2: ragged batch, multi-tile grid, no jnp.pad of the logits
    N2, C2 = 20, 32
    inputs2 = jax.random.normal(k3, (N2, C2), dtype=jnp.float32)
    targets2 = jax.random.randint(k4, (N2,), 0, C2, dtype=jnp.int32)
    loss2 = focal_loss(inputs2, targets2, tile_rows=16)   # 2 tiles, 12 invalid rows in last
    jax.block_until_ready(loss2)
    ref2 = focal_loss_ref(inputs2, targets2)
    assert jnp.allclose(loss2, ref2, rtol=1e-5, atol=1e-6), (loss2, ref2)

    # Case 3: bf16 inputs (DMA'd as bf16, cast to f32 in-kernel), multi-tile
    N3, C3 = 40, 32
    inputs3 = jax.random.normal(k5, (N3, C3), dtype=jnp.float32).astype(jnp.bfloat16)
    targets3 = jax.random.randint(k6, (N3,), 0, C3, dtype=jnp.int32)
    loss3 = focal_loss(inputs3, targets3, tile_rows=16)   # 3 tiles, ragged last tile
    jax.block_until_ready(loss3)
    ref3 = focal_loss_ref(inputs3, targets3)
    assert jnp.allclose(loss3, ref3, rtol=1e-4, atol=1e-5), (loss3, ref3)

    print("KERNEL_OK")
</pallas_src>

<mosaic_0001>
module attributes {stable_mosaic.version = 11 : i64} {
  func.func @_focal_loss_kernel(%arg0: i32, %arg1: memref<16x32xf32, #tpu.memory_space<vmem>>, %arg2: memref<16x1xi32, #tpu.memory_space<vmem>>, %arg3: memref<1x128xf32, #tpu.memory_space<vmem>>) attributes {dimension_semantics = [#tpu.dimension_semantics<parallel>], iteration_bounds = array<i64: 1>, scalar_prefetch = 0 : i64, scratch_operands = 0 : i64, tpu.core_type = #tpu.core_type<tc>, window_params = [{transform_indices = @transform_0, window_bounds = array<i64: 16, 32>}, {transform_indices = @transform_1, window_bounds = array<i64: 16, 1>}, {transform_indices = @transform_2, window_bounds = array<i64: 1, 128>}]} {
    %c0 = arith.constant 0 : index
    %c0_0 = arith.constant 0 : index
    %0 = vector.load %arg1[%c0, %c0_0] : memref<16x32xf32, #tpu.memory_space<vmem>>, vector<16x32xf32>
    %c0_1 = arith.constant 0 : index
    %c0_2 = arith.constant 0 : index
    %1 = vector.load %arg2[%c0_1, %c0_2] : memref<16x1xi32, #tpu.memory_space<vmem>>, vector<16x1xi32>
    %cst = arith.constant dense<0xFF800000> : vector<16xf32>
    %2 = vector.multi_reduction <maximumf>, %0, %cst [1] : vector<16x32xf32> to vector<16xf32>
    %3 = vector.shape_cast %2 : vector<16xf32> to vector<16x1xf32>
    %4 = vector.broadcast %3 : vector<16x1xf32> to vector<16x32xf32>
    %5 = arith.subf %0, %4 : vector<16x32xf32>
    %6 = math.exp %5 : vector<16x32xf32>
    %cst_3 = arith.constant dense<0.000000e+00> : vector<16xf32>
    %7 = vector.multi_reduction <add>, %6, %cst_3 [1] : vector<16x32xf32> to vector<16xf32>
    %8 = vector.shape_cast %7 : vector<16xf32> to vector<16x1xf32>
    %9 = tpu.iota {dimensions = array<i32: 1>} : vector<16x32xi32>
    %10 = vector.broadcast %1 : vector<16x1xi32> to vector<16x32xi32>
    %11 = arith.cmpi eq, %9, %10 : vector<16x32xi32>
    %cst_4 = arith.constant 0.000000e+00 : f32
    %12 = vector.broadcast %cst_4 : f32 to vector<16x32xf32>
    %13 = arith.select %11, %0, %12 : vector<16x32xi1>, vector<16x32xf32>
    %cst_5 = arith.constant dense<0.000000e+00> : vector<16xf32>
    %14 = vector.multi_reduction <add>, %13, %cst_5 [1] : vector<16x32xf32> to vector<16xf32>
    %15 = vector.shape_cast %14 : vector<16xf32> to vector<16x1xf32>
    %16 = arith.subf %15, %3 : vector<16x1xf32>
    %17 = math.log %8 : vector<16x1xf32>
    %18 = arith.subf %16, %17 : vector<16x1xf32>
    %19 = math.exp %18 : vector<16x1xf32>
    %cst_6 = arith.constant 1.000000e+00 : f32
    %20 = vector.broadcast %cst_6 : f32 to vector<16x1xf32>
    %21 = arith.subf %20, %19 : vector<16x1xf32>
    %22 = arith.mulf %21, %21 : vector<16x1xf32>
    %cst_7 = arith.constant -2.500000e-01 : f32
    %23 = vector.broadcast %cst_7 : f32 to vector<16x1xf32>
    %24 = arith.mulf %23, %22 : vector<16x1xf32>
    %25 = arith.mulf %24, %18 : vector<16x1xf32>
    %26 = vector.shape_cast %25 : vector<16x1xf32> to vector<1x16x1xf32>
    %cst_8 = arith.constant dense<0.000000e+00> : vector<1xf32>
    %27 = vector.multi_reduction <add>, %26, %cst_8 [1, 2] : vector<1x16x1xf32> to vector<1xf32>
    %28 = vector.shape_cast %27 : vector<1xf32> to vector<1x1x1xf32>
    %29 = vector.extract %28[0, 0, 0] : f32 from vector<1x1x1xf32>
    %30 = vector.broadcast %29 : f32 to vector<1x128xf32>
    %c0_9 = arith.constant 0 : index
    %c0_10 = arith.constant 0 : index
    %31 = vector.load %arg3[%c0_9, %c0_10] : memref<1x128xf32, #tpu.memory_space<vmem>>, vector<1x128xf32>
    tpu.vector_store %arg3[%c0_9, %c0_10], %30 {strides = array<i32>} : memref<1x128xf32, #tpu.memory_space<vmem>>, vector<1x128xf32>,
    %c0_i32 = arith.constant 0 : i32
    %32 = arith.cmpi eq, %arg0, %c0_i32 : i32
    %33 = arith.extui %32 : i1 to i32
    %c0_i32_11 = arith.constant 0 : i32
    %34 = arith.cmpi ne, %33, %c0_i32_11 : i32
    scf.if %34 {
      %35 = tpu.iota {dimensions = array<i32: 0>} : vector<16x1xi32>
      %c8_i32 = arith.constant 8 : i32
      %36 = vector.broadcast %c8_i32 : i32 to vector<16x1xi32>
      %37 = arith.cmpi slt, %35, %36 : vector<16x1xi32>
      %cst_12 = arith.constant 0.000000e+00 : f32
      %38 = vector.broadcast %cst_12 : f32 to vector<16x1xf32>
      %39 = arith.select %37, %25, %38 : vector<16x1xi1>, vector<16x1xf32>
      %40 = vector.shape_cast %39 : vector<16x1xf32> to vector<1x16x1xf32>
      %cst_13 = arith.constant dense<0.000000e+00> : vector<1xf32>
      %41 = vector.multi_reduction <add>, %40, %cst_13 [1, 2] : vector<1x16x1xf32> to vector<1xf32>
      %42 = vector.shape_cast %41 : vector<1xf32> to vector<1x1x1xf32>
      %43 = vector.extract %42[0, 0, 0] : f32 from vector<1x1x1xf32>
      %44 = vector.broadcast %43 : f32 to vector<1x128xf32>
      %c0_14 = arith.constant 0 : index
      %c0_15 = arith.constant 0 : index
      %45 = vector.load %arg3[%c0_14, %c0_15] : memref<1x128xf32, #tpu.memory_space<vmem>>, vector<1x128xf32>
      tpu.vector_store %arg3[%c0_14, %c0_15], %44 {strides = array<i32>} : memref<1x128xf32, #tpu.memory_space<vmem>>, vector<1x128xf32>,
    } else {
    }
    return
  }
  func.func @transform_0(%arg0: i32) -> (i32, i32) {
    %c0_i32 = arith.constant 0 : i32
    %c0_i32_0 = arith.constant 0 : i32
    return %arg0, %c0_i32 : i32, i32
  }
  func.func @transform_1(%arg0: i32) -> (i32, i32) {
    %c0_i32 = arith.constant 0 : i32
    %c0_i32_0 = arith.constant 0 : i32
    return %arg0, %c0_i32 : i32, i32
  }
  func.func @transform_2(%arg0: i32) -> (i32, i32) {
    %c0_i32 = arith.constant 0 : i32
    %c0_i32_0 = arith.constant 0 : i32
    return %c0_i32, %arg0 : i32, i32
  }
}

</mosaic_0001>

<llo_original>
// kernel: tpu_custom_call.1
$region0: #{tpu_custom_call.1}
  #allocation0 [shape = 'u32[]', space=smem, size = 0x4, offset = 0x4, fixed_abs, tag = 'smem constant byte address 0x4 - core index']
  #allocation1 [shape = 'u32[144,128]{1,0:T(1,128)}', space=vmem, size = 0x12000, scoped, tag = 'internal scratch']
  %s0 = inlined_call_operand.vmem [shape: f32[8,32], index: 0, kind: input, shape index: {}]
  %s1 = inlined_call_operand.vmem [shape: s32[8,1], index: 1, kind: input, shape index: {}]
  %s2 = inlined_call_operand.hbm [shape: f32[1,128], index: 2, kind: output, shape index: {}]
  %s3 = sld [smem:[#allocation0]]
  $region22: #{tpu_custom_call.1} parent=0
    _
  %s5 = ssub.s32 1, %s3
  %s6 = scalar_select 0, %s5, %s3
  $region1: #{tpu_custom_call.1} parent=0
    #allocation2 [shape = 'u8[512]{0}', space=vmem, size = 0x400, scoped, tag = 'output window, operand 0, single buffered']
    #allocation3 [shape = 's32[1]{0}', space=sflag, size = 0x4, scoped, tag = 'scoped memory for tpu_custom_call.1']
    %7 = vsyncpa [#allocation3], 0
    // Predicated region
    $region2: #{tpu_custom_call.1} parent=1 // pred_check
      _
    $region3: #{tpu_custom_call.1} parent=1 // pred_check_branch
      %9 = sbr.rel (0) target = $region5
    $region4: #{tpu_custom_call.1} parent=1 // pred_region
      _
    $region5: #{tpu_custom_call.1} parent=1 // pred_fallthru
      _
    // Predicated region
    $region6: #{tpu_custom_call.1} parent=1 // pred_check
      _
    $region7: #{tpu_custom_call.1} parent=1 // pred_check_branch
      %11 = sbr.rel (0) target = $region9
    $region8: #{tpu_custom_call.1} parent=1 // pred_region
      _
    $region9: #{tpu_custom_call.1} parent=1 // pred_fallthru
      _
    %v12 = vld [vmem:[%s0] sm:$0xff]
    %v13 = vld [vmem:[%s0 + $0x8] sm:$0xff]
    %v14 = vld [vmem:[%s1] sm:$0xff]
    %v15 = vld [vmem:[%s1 + $0x8] sm:$0xff]
    %vm16 = vcmask 261120
    %v17 = vsel %vm16, %v12, -inf
    %18 = vmax.xlane.f32.xlu0 %v17
    %v19 = vpop.xlane.xlu0 %18
    %v20 = vsel %vm16, %v13, -inf
    %21 = vmax.xlane.f32.xlu0 %v20
    %v22 = vpop.xlane.xlu0 %21
    %v23 = vsub.f32 %v12, %v19
    %v24 = vsub.f32 %v13, %v22
    %v25 = vmul.f32 %v23, 1.442695
    %v26 = vpow.pop %v25
    %v27 = vmul.f32 %v24, 1.442695
    %v28 = vpow.pop %v27
    %v29 = vsel %vm16, %v26, 0.0
    %30 = vadd.xlane.f32.xlu0 %v29
    %v31 = vpop.xlane.xlu0 %30
    %v32 = vsel %vm16, %v28, 0.0
    %33 = vadd.xlane.f32.xlu0 %v32
    %v34 = vpop.xlane.xlu0 %33
    %v35 = vlaneseq
    %v36 = vand.u32 %v35, 127
    %37 = vset.pattern.permute.xlu0 0
    %38 = vperm.xlu0 %37, %v14
    %v39 = vpop.permute.xlu0 %38
    %40 = vset.pattern.permute.xlu0 0
    %41 = vperm.xlu0 %40, %v15
    %v42 = vpop.permute.xlu0 %41
    %vm43 = vcmp.eq.s32.totalorder %v36, %v39
    %vm44 = vcmp.eq.s32.totalorder %v36, %v42
    %v45 = vsel %vm43, %v12, 0.0
    %v46 = vsel %vm44, %v13, 0.0
    %v47 = vsel %vm16, %v45, 0.0
    %48 = vadd.xlane.f32.xlu0 %v47
    %v49 = vpop.xlane.xlu0 %48
    %v50 = vsel %vm16, %v46, 0.0
    %51 = vadd.xlane.f32.xlu0 %v50
    %v52 = vpop.xlane.xlu0 %51
    %v53 = vsub.f32 %v49, %v19
    %v54 = vsub.f32 %v52, %v22
    %v55 = vlog2.pop %v31
    %v56 = vmul.f32 %v55, 0.6931472
    %v57 = vlog2.pop %v34
    %v58 = vmul.f32 %v57, 0.6931472
    %v59 = vsub.f32 %v53, %v56
    %v60 = vsub.f32 %v54, %v58
    %v61 = vmul.f32 %v59, 1.442695
    %v62 = vpow.pop %v61
    %v63 = vmul.f32 %v60, 1.442695
    %v64 = vpow.pop %v63
    %v65 = vsub.f32 1.0, %v62
    %v66 = vsub.f32 1.0, %v64
    %v67 = vmul.f32 %v65, %v65
    %v68 = vmul.f32 %v66, %v66
    %v69 = vmul.f32 %v67, -0.25
    %v70 = vmul.f32 %v68, -0.25
    %v71 = vmul.f32 %v69, %v59
    %v72 = vmul.f32 %v70, %v60
    %vm73 = vcmask 7168
    %v74 = vsel %vm73, %v71, 0.0
    %v75 = vsel %vm73, %v72, 0.0
    %v76 = vadd.f32 %v74, %v75
    %77 = vadd.xlane.f32.xlu0 %v76
    %v78 = vpop.xlane.xlu0 %77
    %v79 = vrot.slane %v78, 4
    %v80 = vadd.f32 %v78, %v79
    %v81 = vrot.slane %v80, 2
    %v82 = vadd.f32 %v80, %v81
    %v83 = vrot.slane %v82, 1
    %v84 = vadd.f32 %v82, %v83
    %s85 = vtos %v84
    %v86 = vstv %s85
    %87 = vst [vmem:[#allocation2] sm:$0x1] %v86
    %p88 = scmp.eq.s32.totalorder 0, 0
    // Predicated region
    $region10: #{tpu_custom_call.1} parent=1 // pred_check
      %p89 = pneg %p88
    $region11: #{tpu_custom_call.1} parent=1 // pred_check_branch
      %91 = sbr.rel (%p89) target = $region13
    $region12: #{tpu_custom_call.1} parent=1 // pred_region
      %v92 = vlaneseq
      %v93 = vshrl.u32 %v92, 7
      %v94 = vadd.s32 %v93, 8
      %vm95 = vcmp.lt.s32.totalorder %v93, 8
      %vm96 = vcmp.lt.s32.totalorder %v94, 8
      %v97 = vsel %vm95, %v71, 0.0
      %v98 = vsel %vm96, %v72, 0.0
      %v99 = vsel %vm73, %v97, 0.0
      %v100 = vsel %vm73, %v98, 0.0
      %v101 = vadd.f32 %v99, %v100
      %102 = vadd.xlane.f32.xlu0 %v101
      %v103 = vpop.xlane.xlu0 %102
      %v104 = vrot.slane %v103, 4
      %v105 = vadd.f32 %v103, %v104
      %v106 = vrot.slane %v105, 2
      %v107 = vadd.f32 %v105, %v106
      %v108 = vrot.slane %v107, 1
      %v109 = vadd.f32 %v107, %v108
      %s110 = vtos %v109
      %v111 = vstv %s110
      %112 = vst [vmem:[#allocation2] sm:$0x1] %v111
    $region13: #{tpu_custom_call.1} parent=1 // pred_fallthru
      _
    // Predicated region
    $region14: #{tpu_custom_call.1} parent=1 // pred_check
      _
    $region15: #{tpu_custom_call.1} parent=1 // pred_check_branch
      %114 = sbr.rel (0) target = $region17
    $region16: #{tpu_custom_call.1} parent=1 // pred_region
      %s116 = ssub.s32 16, 16
      %117 = vsyncadd [#allocation3], %s116
      %s119 = sshll.u32 [#allocation2], 4
      %s120 = int_to_ptr.vmem [resolvable:$true] %s119
      %122 = dma.vmem_to_hbm [thread:$0]  %s120, 16, %s2, [#allocation3]
    $region17: #{tpu_custom_call.1} parent=1 // pred_fallthru
      _
    // Predicated region
    $region18: #{tpu_custom_call.1} parent=1 // pred_check
      _
    $region19: #{tpu_custom_call.1} parent=1 // pred_check_branch
      %124 = sbr.rel (0) target = $region21
    $region20: #{tpu_custom_call.1} parent=1 // pred_region
      %125 = dma.done [#allocation3], 16
    $region21: #{tpu_custom_call.1} parent=1 // pred_fallthru
      _
    %126 = vsyncpa [#allocation3], 1

</llo_original>
